<compile_context>
chip_gen: v6e
topology: v6e:2x2x1
jax: 0.10.0
libtpu: 0.0.40
codegen_flags: <defaults>
</compile_context>

<pallas_src>
import functools

import numpy as np
import jax
import jax.numpy as jnp
from jax import lax
from jax.experimental import pallas as pl
from jax.experimental.pallas import tpu as pltpu

_LANE = 128
_CHUNK = 1024  # inner-loop chunk width (lanes)


def _dice_partial_kernel(x1_ref, x2_ref, t_ref, out_i_ref, out_c_ref, *,
                         tile_s, chunk, n_chunks, n_tiles, n_half, rem,
                         ragged, needs_guard):
    """Accumulate per-(split, batch) partial sums into resident (C, 1) outputs:
         out_i[c] += sum_tile x1*x2*[t == c]
         out_c[c] += sum_tile (x1 + x2 + [t == c])
    """
    h = pl.program_id(0)
    s = pl.program_id(2)
    tile_idx = h * n_half + s          # global spatial tile index

    @pl.when(s == 0)
    def _():
        out_i_ref[...] = jnp.zeros_like(out_i_ref)
        out_c_ref[...] = jnp.zeros_like(out_c_ref)

    num_c = x1_ref.shape[0]

    def compute():
        cls = lax.broadcasted_iota(jnp.int32, (num_c, 1), 0)   # (C, 1)
        if ragged:
            lane = lax.broadcasted_iota(jnp.int32, (1, chunk), 1)
            # valid lanes in this tile (rem on the very last spatial tile).
            lim = jnp.where(tile_idx == n_tiles - 1, rem, tile_s)

        def chunk_sums(x1c, x2c, tc, off, carry):
            inter, card = carry
            x1c = x1c.astype(jnp.float32)
            x2c = x2c.astype(jnp.float32)
            tc = tc.astype(jnp.int32)                          # (1, chunk)
            xsum = x1c + x2c
            if ragged:
                valid = lane < (lim - off)                     # (1, chunk)
                # invalid lanes: class -1 (matches nothing), cardinality 0.
                tc = jnp.where(valid, tc, -1)
                xsum = jnp.where(valid, xsum, 0.0)
            mask = tc == cls                                   # (C, chunk) one-hot
            inter = inter + jnp.sum(jnp.where(mask, x1c * x2c, 0.0),
                                    axis=-1, keepdims=True)
            card = (card
                    + jnp.sum(xsum, axis=-1, keepdims=True)
                    + jnp.sum(mask.astype(jnp.float32), axis=-1, keepdims=True))
            return inter, card

        init = (jnp.zeros((num_c, 1), jnp.float32),
                jnp.zeros((num_c, 1), jnp.float32))

        if n_chunks == 1:
            inter, card = chunk_sums(x1_ref[...], x2_ref[...], t_ref[...], 0, init)
        else:
            def body(r, carry):
                off = pl.multiple_of(r * chunk, _LANE)
                return chunk_sums(x1_ref[:, pl.ds(off, chunk)],
                                  x2_ref[:, pl.ds(off, chunk)],
                                  t_ref[:, pl.ds(off, chunk)], off, carry)
            inter, card = lax.fori_loop(0, n_chunks, body, init)

        out_i_ref[...] += inter
        out_c_ref[...] += card

    if needs_guard:
        # Odd tile count: the second spatial half has one fewer real tile; the
        # extra step re-reads a clamped (valid) tile but contributes nothing.
        @pl.when(tile_idx < n_tiles)
        def _():
            compute()
    else:
        compute()


def _sublane_pack(itemsize):
    return {1: 32, 2: 16, 4: 8}.get(int(itemsize), 8)


def _round_up(x, m):
    return ((x + m - 1) // m) * m


def _pick_chunk(ts):
    for c in (_CHUNK, 512, 256, _LANE):
        if ts % c == 0:
            return c
    return ts  # single small / full-extent tile


def three_dice_loss(inputs_1, inputs_2, targets, smooth=1e-8,
                    tile_s=None, target_block_bytes=8 << 20):
    """inputs_1, inputs_2: [B, C, *spatial] float; targets: [B, 1, *spatial] or
    [B, *spatial] int.

    num_classes is taken from inputs_1.shape[1]; the PyTorch module only
    type-checks when targets.max()+1 equals that channel count, so no
    device->host sync is needed here.
    """
    if targets.ndim == inputs_1.ndim:
        targets = jnp.squeeze(targets, axis=1)

    B = int(inputs_1.shape[0])
    C = int(inputs_1.shape[1])
    S = int(np.prod(inputs_1.shape[2:]))

    # Stream the native floating dtype (no wrapper-side f32 up-cast).
    def _as_stream(x):
        if x.dtype in (jnp.float32, jnp.bfloat16, jnp.float16):
            return x
        return x.astype(jnp.float32)

    x1 = _as_stream(inputs_1).reshape(B, C, S)
    x2 = _as_stream(inputs_2).reshape(B, C, S)

    # Targets stream as-is when cheap (int8 / int32) -> no wrapper copy.
    if targets.dtype not in (jnp.int8, jnp.int32):
        targets = targets.astype(jnp.int32)
    t = targets.reshape(B, 1, S)

    i1 = jnp.dtype(x1.dtype).itemsize
    i2 = jnp.dtype(x2.dtype).itemsize
    cp1 = _round_up(max(C, 1), _sublane_pack(i1))
    cp2 = _round_up(max(C, 1), _sublane_pack(i2))
    # VMEM bytes per lane of the tile: 2 buffers per operand; a (1, ts) target
    # block pads to 32 B/lane regardless of int8/int32.
    per_lane = 2 * (cp1 * i1 + cp2 * i2) + 2 * 32

    try:
        phys_vmem = int(pltpu.get_tpu_info().vmem_capacity_bytes)
    except Exception:
        phys_vmem = 64 << 20  # conservative (v7x-sized) fallback
    block_budget = min(int(phys_vmem * 0.5), 48 << 20)

    ts_cap = max(_CHUNK, min(block_budget // per_lane,
                             target_block_bytes // max(1, C * max(i1, i2))))

    if tile_s is not None:
        ts = min(S, max(_LANE, (int(tile_s) // _LANE) * _LANE))
    elif S < 2 * _CHUNK:
        ts = S
    else:
        ts = max(_CHUNK, min((ts_cap // _CHUNK) * _CHUNK, (S // _CHUNK) * _CHUNK))
        if B == 1 and ts >= S:
            # Force >= 2 spatial tiles so both v7x TensorCores get work at B==1.
            ts = max(_CHUNK, (S // (2 * _CHUNK)) * _CHUNK)

    n_tiles = int(pl.cdiv(S, ts))
    rem = S - (n_tiles - 1) * ts          # valid lanes in the last tile
    ragged = (S % ts) != 0
    chunk = _pick_chunk(ts)
    n_chunks = ts // chunk

    n_split = 2 if n_tiles >= 2 else 1
    n_half = int(pl.cdiv(n_tiles, n_split))
    needs_guard = (n_split * n_half) != n_tiles

    ts_pad = _round_up(ts, _LANE)
    vmem_need = ts_pad * per_lane + (1 << 20)
    vmem_limit = int(min(max(vmem_need + (8 << 20), 32 << 20),
                         phys_vmem - (4 << 20)))
    vmem_limit = max(vmem_limit, vmem_need)

    if needs_guard:
        def tile_of(h, s):
            return jnp.minimum(h * n_half + s, n_tiles - 1)
    else:
        def tile_of(h, s):
            return h * n_half + s

    x_spec = pl.BlockSpec((None, C, ts), lambda h, b, s: (b, 0, tile_of(h, s)))
    t_spec = pl.BlockSpec((None, 1, ts), lambda h, b, s: (b, 0, tile_of(h, s)))
    o_spec = pl.BlockSpec((None, None, C, 1), lambda h, b, s: (h, b, 0, 0))

    kernel = functools.partial(
        _dice_partial_kernel, tile_s=ts, chunk=chunk, n_chunks=n_chunks,
        n_tiles=n_tiles, n_half=n_half, rem=rem, ragged=ragged,
        needs_guard=needs_guard)

    out_i, out_c = pl.pallas_call(
        kernel,
        out_shape=(jax.ShapeDtypeStruct((n_split, B, C, 1), jnp.float32),
                   jax.ShapeDtypeStruct((n_split, B, C, 1), jnp.float32)),
        grid_spec=pltpu.PrefetchScalarGridSpec(
            num_scalar_prefetch=0,
            grid=(n_split, B, n_half),
            in_specs=[x_spec, x_spec, t_spec],
            out_specs=[o_spec, o_spec],
            scratch_shapes=[],
        ),
        compiler_params=pltpu.CompilerParams(
            dimension_semantics=("parallel", "parallel", "arbitrary"),
            vmem_limit_bytes=vmem_limit,
        ),
    )(x1, x2, t)

    # Tiny finish in plain JAX: cross-(split, batch) sum, dice, mean, 1 - dice.
    inter = jnp.sum(out_i[..., 0], axis=(0, 1))     # (C,)
    card = jnp.sum(out_c[..., 0], axis=(0, 1))      # (C,)
    dice = jnp.mean((3.0 * inter + smooth) / (card + smooth))
    return (1.0 - dice).astype(jnp.float32)


def _reference_loss(inputs_1, inputs_2, targets, smooth=1e-8):
    t = jnp.squeeze(targets, axis=1) if targets.ndim == inputs_1.ndim else targets
    num_classes = inputs_1.shape[1]
    one_hot = jax.nn.one_hot(t, num_classes, axis=1, dtype=jnp.float32)
    x1 = inputs_1.astype(jnp.float32)
    x2 = inputs_2.astype(jnp.float32)
    dims = (0,) + tuple(range(2, x1.ndim))
    inter = jnp.sum(x1 * x2 * one_hot, axis=dims)
    card = jnp.sum(x1 + x2 + one_hot, axis=dims)
    dice = jnp.mean((3.0 * inter + smooth) / (card + smooth))
    return 1.0 - dice


if __name__ == "__main__":
    key = jax.random.PRNGKey(0)
    k1, k2, k3, k4, k5 = jax.random.split(key, 5)

    # Case 1: B=2 3-D volume [B, C, D, H, W]; single full-extent tile.
    B, C, D, H, W = 2, 4, 4, 16, 16
    x1 = jax.random.normal(k1, (B, C, D, H, W), dtype=jnp.float32)
    x2 = jax.random.normal(k2, (B, C, D, H, W), dtype=jnp.float32)
    tgt = jax.random.randint(k3, (B, 1, D, H, W), 0, C, dtype=jnp.int32)
    # guarantee targets.max()+1 == C, as the PyTorch module assumes.
    tgt = tgt.at[0, 0, 0, 0, 0].set(C - 1)

    ref = jax.block_until_ready(_reference_loss(x1, x2, tgt))
    out = jax.block_until_ready(three_dice_loss(x1, x2, tgt))
    assert np.allclose(np.asarray(out), np.asarray(ref), rtol=1e-5, atol=1e-5), (
        float(out), float(ref))

    # Case 2: forced tiling (S=1024, tile=384 -> 384/384/256): exercises the
    # chunk loop, ragged lane masking, the clamped index_map and the guarded
    # 2-way spatial split with an odd tile count.
    out2 = jax.block_until_ready(three_dice_loss(x1, x2, tgt, tile_s=384))
    assert np.allclose(np.asarray(out2), np.asarray(ref), rtol=1e-5, atol=1e-5), (
        float(out2), float(ref))

    # Case 3: B=1 bf16 inputs — native-dtype streaming + forced 2-way split so
    # both v7x TensorCores get work.
    B2, D2 = 1, 8
    y1 = jax.random.normal(k4, (B2, C, D2, H, W), dtype=jnp.float32).astype(jnp.bfloat16)
    y2 = jax.random.normal(k5, (B2, C, D2, H, W), dtype=jnp.float32).astype(jnp.bfloat16)
    tg2 = jax.random.randint(k3, (B2, 1, D2, H, W), 0, C, dtype=jnp.int32)
    tg2 = tg2.at[0, 0, 0, 0, 0].set(C - 1)
    ref2 = jax.block_until_ready(_reference_loss(y1, y2, tg2))
    out3 = jax.block_until_ready(three_dice_loss(y1, y2, tg2))
    assert np.allclose(np.asarray(out3), np.asarray(ref2), rtol=2e-3, atol=2e-3), (
        float(out3), float(ref2))

    print("KERNEL_OK")
</pallas_src>

<mosaic_0001>
module attributes {stable_mosaic.version = 11 : i64} {
  func.func @_dice_partial_kernel(%arg0: i32, %arg1: i32, %arg2: i32, %arg3: memref<1x4x1024xf32, #tpu.memory_space<vmem>>, %arg4: memref<1x4x1024xf32, #tpu.memory_space<vmem>>, %arg5: memref<1x1x1024xi32, #tpu.memory_space<vmem>>, %arg6: memref<1x1x4x1xf32, #tpu.memory_space<vmem>>, %arg7: memref<1x1x4x1xf32, #tpu.memory_space<vmem>>) attributes {dimension_semantics = [#tpu.dimension_semantics<parallel>, #tpu.dimension_semantics<parallel>, #tpu.dimension_semantics<arbitrary>], iteration_bounds = array<i64: 1, 2, 1>, scalar_prefetch = 0 : i64, scratch_operands = 0 : i64, tpu.core_type = #tpu.core_type<tc>, window_params = [{transform_indices = @transform_0, window_bounds = array<i64: 1, 4, 1024>}, {transform_indices = @transform_1, window_bounds = array<i64: 1, 4, 1024>}, {transform_indices = @transform_2, window_bounds = array<i64: 1, 1, 1024>}, {transform_indices = @transform_3, window_bounds = array<i64: 1, 1, 4, 1>}, {transform_indices = @transform_4, window_bounds = array<i64: 1, 1, 4, 1>}]} {
    %c0_i32 = arith.constant 0 : i32
    %0 = arith.cmpi eq, %arg2, %c0_i32 : i32
    %1 = arith.extui %0 : i1 to i32
    %c0_i32_0 = arith.constant 0 : i32
    %2 = arith.cmpi ne, %1, %c0_i32_0 : i32
    scf.if %2 {
      %cst_30 = arith.constant 0.000000e+00 : f32
      %42 = vector.broadcast %cst_30 : f32 to vector<4x1xf32>
      %c0_31 = arith.constant 0 : index
      %c0_32 = arith.constant 0 : index
      %c0_33 = arith.constant 0 : index
      %c0_34 = arith.constant 0 : index
      %43 = vector.load %arg6[%c0_31, %c0_32, %c0_33, %c0_34] : memref<1x1x4x1xf32, #tpu.memory_space<vmem>>, vector<1x1x4x1xf32>
      %44 = vector.shape_cast %43 : vector<1x1x4x1xf32> to vector<4x1xf32>
      %45 = vector.shape_cast %42 : vector<4x1xf32> to vector<1x1x4x1xf32>
      tpu.vector_store %arg6[%c0_31, %c0_32, %c0_33, %c0_34], %45 {strides = array<i32>} : memref<1x1x4x1xf32, #tpu.memory_space<vmem>>, vector<1x1x4x1xf32>,
      %cst_35 = arith.constant 0.000000e+00 : f32
      %46 = vector.broadcast %cst_35 : f32 to vector<4x1xf32>
      %c0_36 = arith.constant 0 : index
      %c0_37 = arith.constant 0 : index
      %c0_38 = arith.constant 0 : index
      %c0_39 = arith.constant 0 : index
      %47 = vector.load %arg7[%c0_36, %c0_37, %c0_38, %c0_39] : memref<1x1x4x1xf32, #tpu.memory_space<vmem>>, vector<1x1x4x1xf32>
      %48 = vector.shape_cast %47 : vector<1x1x4x1xf32> to vector<4x1xf32>
      %49 = vector.shape_cast %46 : vector<4x1xf32> to vector<1x1x4x1xf32>
      tpu.vector_store %arg7[%c0_36, %c0_37, %c0_38, %c0_39], %49 {strides = array<i32>} : memref<1x1x4x1xf32, #tpu.memory_space<vmem>>, vector<1x1x4x1xf32>,
    } else {
    }
    %3 = tpu.iota {dimensions = array<i32: 0>} : vector<4x1xi32>
    %cst = arith.constant 0.000000e+00 : f32
    %4 = vector.broadcast %cst : f32 to vector<4x1xf32>
    %cst_1 = arith.constant 0.000000e+00 : f32
    %5 = vector.broadcast %cst_1 : f32 to vector<4x1xf32>
    %c0 = arith.constant 0 : index
    %c0_2 = arith.constant 0 : index
    %c0_3 = arith.constant 0 : index
    %6 = vector.load %arg3[%c0, %c0_2, %c0_3] : memref<1x4x1024xf32, #tpu.memory_space<vmem>>, vector<1x4x1024xf32>
    %7 = vector.shape_cast %6 : vector<1x4x1024xf32> to vector<4x1024xf32>
    %c0_4 = arith.constant 0 : index
    %c0_5 = arith.constant 0 : index
    %c0_6 = arith.constant 0 : index
    %8 = vector.load %arg4[%c0_4, %c0_5, %c0_6] : memref<1x4x1024xf32, #tpu.memory_space<vmem>>, vector<1x4x1024xf32>
    %9 = vector.shape_cast %8 : vector<1x4x1024xf32> to vector<4x1024xf32>
    %c0_7 = arith.constant 0 : index
    %c0_8 = arith.constant 0 : index
    %c0_9 = arith.constant 0 : index
    %10 = vector.load %arg5[%c0_7, %c0_8, %c0_9] : memref<1x1x1024xi32, #tpu.memory_space<vmem>>, vector<1x1x1024xi32>
    %11 = vector.shape_cast %10 : vector<1x1x1024xi32> to vector<1x1024xi32>
    %12 = arith.addf %7, %9 : vector<4x1024xf32>
    %13 = vector.broadcast %11 : vector<1x1024xi32> to vector<4x1024xi32>
    %14 = vector.broadcast %3 : vector<4x1xi32> to vector<4x1024xi32>
    %15 = arith.cmpi eq, %13, %14 : vector<4x1024xi32>
    %16 = arith.mulf %7, %9 : vector<4x1024xf32>
    %cst_10 = arith.constant 0.000000e+00 : f32
    %17 = vector.broadcast %cst_10 : f32 to vector<4x1024xf32>
    %18 = arith.select %15, %16, %17 : vector<4x1024xi1>, vector<4x1024xf32>
    %cst_11 = arith.constant dense<0.000000e+00> : vector<4xf32>
    %19 = vector.multi_reduction <add>, %18, %cst_11 [1] : vector<4x1024xf32> to vector<4xf32>
    %20 = vector.shape_cast %19 : vector<4xf32> to vector<4x1xf32>
    %21 = arith.addf %4, %20 : vector<4x1xf32>
    %cst_12 = arith.constant dense<0.000000e+00> : vector<4xf32>
    %22 = vector.multi_reduction <add>, %12, %cst_12 [1] : vector<4x1024xf32> to vector<4xf32>
    %23 = vector.shape_cast %22 : vector<4xf32> to vector<4x1xf32>
    %24 = arith.addf %5, %23 : vector<4x1xf32>
    %25 = arith.extui %15 : vector<4x1024xi1> to vector<4x1024xi32>
    %26 = arith.sitofp %25 : vector<4x1024xi32> to vector<4x1024xf32>
    %cst_13 = arith.constant dense<0.000000e+00> : vector<4xf32>
    %27 = vector.multi_reduction <add>, %26, %cst_13 [1] : vector<4x1024xf32> to vector<4xf32>
    %28 = vector.shape_cast %27 : vector<4xf32> to vector<4x1xf32>
    %29 = arith.addf %24, %28 : vector<4x1xf32>
    %c0_14 = arith.constant 0 : index
    %c0_15 = arith.constant 0 : index
    %c0_16 = arith.constant 0 : index
    %c0_17 = arith.constant 0 : index
    %30 = vector.load %arg6[%c0_14, %c0_15, %c0_16, %c0_17] : memref<1x1x4x1xf32, #tpu.memory_space<vmem>>, vector<1x1x4x1xf32>
    %31 = vector.shape_cast %30 : vector<1x1x4x1xf32> to vector<4x1xf32>
    %32 = arith.addf %31, %21 : vector<4x1xf32>
    %c0_18 = arith.constant 0 : index
    %c0_19 = arith.constant 0 : index
    %c0_20 = arith.constant 0 : index
    %c0_21 = arith.constant 0 : index
    %33 = vector.load %arg6[%c0_18, %c0_19, %c0_20, %c0_21] : memref<1x1x4x1xf32, #tpu.memory_space<vmem>>, vector<1x1x4x1xf32>
    %34 = vector.shape_cast %33 : vector<1x1x4x1xf32> to vector<4x1xf32>
    %35 = vector.shape_cast %32 : vector<4x1xf32> to vector<1x1x4x1xf32>
    tpu.vector_store %arg6[%c0_18, %c0_19, %c0_20, %c0_21], %35 {strides = array<i32>} : memref<1x1x4x1xf32, #tpu.memory_space<vmem>>, vector<1x1x4x1xf32>,
    %c0_22 = arith.constant 0 : index
    %c0_23 = arith.constant 0 : index
    %c0_24 = arith.constant 0 : index
    %c0_25 = arith.constant 0 : index
    %36 = vector.load %arg7[%c0_22, %c0_23, %c0_24, %c0_25] : memref<1x1x4x1xf32, #tpu.memory_space<vmem>>, vector<1x1x4x1xf32>
    %37 = vector.shape_cast %36 : vector<1x1x4x1xf32> to vector<4x1xf32>
    %38 = arith.addf %37, %29 : vector<4x1xf32>
    %c0_26 = arith.constant 0 : index
    %c0_27 = arith.constant 0 : index
    %c0_28 = arith.constant 0 : index
    %c0_29 = arith.constant 0 : index
    %39 = vector.load %arg7[%c0_26, %c0_27, %c0_28, %c0_29] : memref<1x1x4x1xf32, #tpu.memory_space<vmem>>, vector<1x1x4x1xf32>
    %40 = vector.shape_cast %39 : vector<1x1x4x1xf32> to vector<4x1xf32>
    %41 = vector.shape_cast %38 : vector<4x1xf32> to vector<1x1x4x1xf32>
    tpu.vector_store %arg7[%c0_26, %c0_27, %c0_28, %c0_29], %41 {strides = array<i32>} : memref<1x1x4x1xf32, #tpu.memory_space<vmem>>, vector<1x1x4x1xf32>,
    return
  }
  func.func @transform_0(%arg0: i32, %arg1: i32, %arg2: i32) -> (i32, i32, i32) {
    %c1_i32 = arith.constant 1 : i32
    %0 = arith.muli %arg0, %c1_i32 : i32
    %1 = arith.addi %0, %arg2 : i32
    %c0_i32 = arith.constant 0 : i32
    %c0_i32_0 = arith.constant 0 : i32
    return %arg1, %c0_i32, %1 : i32, i32, i32
  }
  func.func @transform_1(%arg0: i32, %arg1: i32, %arg2: i32) -> (i32, i32, i32) {
    %c1_i32 = arith.constant 1 : i32
    %0 = arith.muli %arg0, %c1_i32 : i32
    %1 = arith.addi %0, %arg2 : i32
    %c0_i32 = arith.constant 0 : i32
    %c0_i32_0 = arith.constant 0 : i32
    return %arg1, %c0_i32, %1 : i32, i32, i32
  }
  func.func @transform_2(%arg0: i32, %arg1: i32, %arg2: i32) -> (i32, i32, i32) {
    %c1_i32 = arith.constant 1 : i32
    %0 = arith.muli %arg0, %c1_i32 : i32
    %1 = arith.addi %0, %arg2 : i32
    %c0_i32 = arith.constant 0 : i32
    %c0_i32_0 = arith.constant 0 : i32
    return %arg1, %c0_i32, %1 : i32, i32, i32
  }
  func.func @transform_3(%arg0: i32, %arg1: i32, %arg2: i32) -> (i32, i32, i32, i32) {
    %c0_i32 = arith.constant 0 : i32
    %c0_i32_0 = arith.constant 0 : i32
    %c0_i32_1 = arith.constant 0 : i32
    return %arg0, %arg1, %c0_i32, %c0_i32_0 : i32, i32, i32, i32
  }
  func.func @transform_4(%arg0: i32, %arg1: i32, %arg2: i32) -> (i32, i32, i32, i32) {
    %c0_i32 = arith.constant 0 : i32
    %c0_i32_0 = arith.constant 0 : i32
    %c0_i32_1 = arith.constant 0 : i32
    return %arg0, %arg1, %c0_i32, %c0_i32_0 : i32, i32, i32, i32
  }
}

</mosaic_0001>

<llo_original>
// kernel: tpu_custom_call.1
$region0: #{tpu_custom_call.1}
  #allocation0 [shape = 'u32[]', space=smem, size = 0x4, offset = 0x4, fixed_abs, tag = 'smem constant byte address 0x4 - core index']
  #allocation1 [shape = 'u32[144,128]{1,0:T(1,128)}', space=vmem, size = 0x12000, scoped, tag = 'internal scratch']
  %s0 = inlined_call_operand.hbm [shape: f32[2,4,1024], index: 0, kind: input, shape index: {}]
  %s1 = inlined_call_operand.hbm [shape: f32[2,4,1024], index: 1, kind: input, shape index: {}]
  %s2 = inlined_call_operand.hbm [shape: s32[2,1,1024], index: 2, kind: input, shape index: {}]
  %s3 = inlined_call_operand.vmem [shape: f32[1,2,4,1], index: 3, kind: output, shape index: {0}]
  %s4 = inlined_call_operand.vmem [shape: f32[1,2,4,1], index: 4, kind: output, shape index: {1}]
  %5 = xla_tuple %s3, %s4
  %s6 = sld [smem:[#allocation0]]
  $region69: #{tpu_custom_call.1} parent=0
    _
  %s8 = ssub.s32 1, %s6
  %s9 = scalar_select 0, %s8, %s6
  $region1: #{tpu_custom_call.1} parent=0
    #allocation2 [shape = 'u8[32768]{0}', space=vmem, size = 0x8000, scoped, tag = 'input window, operand 0']
    #allocation3 [shape = 's32[2]{0}', space=sflag, size = 0x8, scoped, tag = 'scoped memory for tpu_custom_call.1']
    #allocation4 [shape = 'u8[32768]{0}', space=vmem, size = 0x8000, scoped, tag = 'input window, operand 1']
    #allocation5 [shape = 's32[2]{0}', space=sflag, size = 0x8, scoped, tag = 'scoped memory for tpu_custom_call.1']
    #allocation6 [shape = 'u8[8192]{0}', space=vmem, size = 0x2000, scoped, tag = 'input window, operand 2']
    %10 = vsyncpa [#allocation3], 0
    %s11 = scalar_lea.sflag [#allocation3], 1
    %12 = vsyncpa %s11, 0
    %13 = vsyncpa [#allocation5], 0
    %s14 = scalar_lea.sflag [#allocation5], 1
    %15 = vsyncpa %s14, 0
    loop: start=0, step=1, limit=4
    $region2: #{tpu_custom_call.1} parent=1 // loop_pre_header
      _
    $region3: #{tpu_custom_call.1} parent=1 // loop_header
      %s17 = sphi 0, %s21
      %p18 = scmp.ge.s32.totalorder %s17, 4
      %s24 = sphi 0, %s43
      %s25 = sphi 0, %s39
      %s26 = sphi 0, %s35
      %s27 = sphi 0, %s24
      %s28 = sphi 0, %s25
      %s29 = sphi 0, %s26
      %s30 = sphi 0, %s27
      %s31 = sphi 0, %s28
      %s32 = sphi 0, %s29
      %s50 = sphi 0, %s52
      %s53 = sphi 0, %s50
      %s54 = sphi 0, %s53
      %s70 = sphi 0, %s54
      %s80 = sphi 0, %s82
      %s83 = sphi 0, %s80
      %s84 = sphi 0, %s83
      %s100 = sphi 0, %s84
      %s110 = sphi 0, %s112
      %s113 = sphi 0, %s110
      %s114 = sphi 0, %s113
      %s130 = sphi 0, %s114
      %s138 = sphi 0, %s140
      %s141 = sphi 0, %s138
      %s142 = sphi 0, %s141
      %s158 = sphi 0, %s142
      %s166 = sphi 0, %s168
      %s169 = sphi 0, %s166
      %s170 = sphi 0, %s169
      %s186 = sphi 0, %s170
    $region4: #{tpu_custom_call.1} parent=1 // loop_header_branch
      %20 = sbr.rel (%p18) target = $region8
    $region5: #{tpu_custom_call.1} parent=1 // loop_body
      %s22 = ssub.s32 %s17, 1
      %s23 = ssub.s32 %s17, 2
      %s33 = sadd.s32 1, %s26
      %p34 = scmp.ge.s32.totalorder %s33, 1
      %s35 = scalar_select %p34, 0, %s33
      %s36 = sadd.s32 1, %s25
      %s37 = scalar_select %p34, %s36, %s25
      %p38 = scmp.ge.s32.totalorder %s37, 2
      %s39 = scalar_select %p38, 0, %s37
      %s40 = sadd.s32 1, %s24
      %s41 = scalar_select %p38, %s40, %s24
      %p42 = scmp.ge.s32.totalorder %s41, 1
      %s43 = scalar_select %p42, 0, %s41
      %s44 = sadd.s32 %s24, %s26
      %s45 = sadd.s32 %s43, %s35
      %s46 = ssub.s32 %s25, %s39
      %s47 = ssub.s32 %s44, %s45
      %s48 = sor.u32 %s46, %s47
      %p49 = scmp.eq.s32.totalorder %s48, 0
      %s51 = sadd.s32 %s50, 1
      %s52 = scalar_select %p49, %s50, %s51
      %p55 = pneg %p49
      %p56 = scmp.eq.s32.totalorder %s17, 1
      %p57 = por %p55, %p56
      %p58 = scmp.ne.s32.totalorder %s50, %s53
      %p59 = scmp.eq.s32.totalorder %s17, 0
      %p60 = por %p58, %p59
      %p61 = scmp.ne.s32.totalorder %s50, %s53
      %p62 = scmp.eq.s32.totalorder %s22, 1
      %p63 = por %p61, %p62
      %p64 = scmp.ne.s32.totalorder %s53, %s54
      %p65 = scmp.eq.s32.totalorder %s22, 0
      %p66 = por %p64, %p65
      %p67 = scmp.ne.s32.totalorder %s53, %s54
      %p68 = scmp.eq.s32.totalorder %s23, 1
      %p69 = por %p67, %p68
      %p71 = scmp.ne.s32.totalorder %s54, %s70
      %p72 = scmp.eq.s32.totalorder %s23, 0
      %p73 = por %p71, %p72
      %s74 = sadd.s32 %s24, %s26
      %s75 = sadd.s32 %s43, %s35
      %s76 = ssub.s32 %s25, %s39
      %s77 = ssub.s32 %s74, %s75
      %s78 = sor.u32 %s76, %s77
      %p79 = scmp.eq.s32.totalorder %s78, 0
      %s81 = sadd.s32 %s80, 1
      %s82 = scalar_select %p79, %s80, %s81
      %p85 = pneg %p79
      %p86 = scmp.eq.s32.totalorder %s17, 1
      %p87 = por %p85, %p86
      %p88 = scmp.ne.s32.totalorder %s80, %s83
      %p89 = scmp.eq.s32.totalorder %s17, 0
      %p90 = por %p88, %p89
      %p91 = scmp.ne.s32.totalorder %s80, %s83
      %p92 = scmp.eq.s32.totalorder %s22, 1
      %p93 = por %p91, %p92
      %p94 = scmp.ne.s32.totalorder %s83, %s84
      %p95 = scmp.eq.s32.totalorder %s22, 0
      %p96 = por %p94, %p95
      %p97 = scmp.ne.s32.totalorder %s83, %s84
      %p98 = scmp.eq.s32.totalorder %s23, 1
      %p99 = por %p97, %p98
      %p101 = scmp.ne.s32.totalorder %s84, %s100
      %p102 = scmp.eq.s32.totalorder %s23, 0
      %p103 = por %p101, %p102
      %s104 = sadd.s32 %s24, %s26
      %s105 = sadd.s32 %s43, %s35
      %s106 = ssub.s32 %s25, %s39
      %s107 = ssub.s32 %s104, %s105
      %s108 = sor.u32 %s106, %s107
      %p109 = scmp.eq.s32.totalorder %s108, 0
      %s111 = sadd.s32 %s110, 1
      %s112 = scalar_select %p109, %s110, %s111
      %p115 = pneg %p109
      %p116 = scmp.eq.s32.totalorder %s17, 1
      %p117 = por %p115, %p116
      %p118 = scmp.ne.s32.totalorder %s110, %s113
      %p119 = scmp.eq.s32.totalorder %s17, 0
      %p120 = por %p118, %p119
      %p121 = scmp.ne.s32.totalorder %s110, %s113
      %p122 = scmp.eq.s32.totalorder %s22, 1
      %p123 = por %p121, %p122
      %p124 = scmp.ne.s32.totalorder %s113, %s114
      %p125 = scmp.eq.s32.totalorder %s22, 0
      %p126 = por %p124, %p125
      %p127 = scmp.ne.s32.totalorder %s113, %s114
      %p128 = scmp.eq.s32.totalorder %s23, 1
      %p129 = por %p127, %p128
      %p131 = scmp.ne.s32.totalorder %s114, %s130
      %p132 = scmp.eq.s32.totalorder %s23, 0
      %p133 = por %p131, %p132
      %s134 = ssub.s32 %s24, %s43
      %s135 = ssub.s32 %s25, %s39
      %s136 = sor.u32 %s134, %s135
      %p137 = scmp.eq.s32.totalorder %s136, 0
      %s139 = sadd.s32 %s138, 1
      %s140 = scalar_select %p137, %s138, %s139
      %p143 = pneg %p137
      %p144 = scmp.eq.s32.totalorder %s17, 1
      %p145 = por %p143, %p144
      %p146 = scmp.ne.s32.totalorder %s138, %s141
      %p147 = scmp.eq.s32.totalorder %s17, 0
      %p148 = por %p146, %p147
      %p149 = scmp.ne.s32.totalorder %s138, %s141
      %p150 = scmp.eq.s32.totalorder %s22, 1
      %p151 = por %p149, %p150
      %p152 = scmp.ne.s32.totalorder %s141, %s142
      %p153 = scmp.eq.s32.totalorder %s22, 0
      %p154 = por %p152, %p153
      %p155 = scmp.ne.s32.totalorder %s141, %s142
      %p156 = scmp.eq.s32.totalorder %s23, 1
      %p157 = por %p155, %p156
      %p159 = scmp.ne.s32.totalorder %s142, %s158
      %p160 = scmp.eq.s32.totalorder %s23, 0
      %p161 = por %p159, %p160
      %s162 = ssub.s32 %s24, %s43
      %s163 = ssub.s32 %s25, %s39
      %s164 = sor.u32 %s162, %s163
      %p165 = scmp.eq.s32.totalorder %s164, 0
      %s167 = sadd.s32 %s166, 1
      %s168 = scalar_select %p165, %s166, %s167
      %p171 = pneg %p165
      %p172 = scmp.eq.s32.totalorder %s17, 1
      %p173 = por %p171, %p172
      %p174 = scmp.ne.s32.totalorder %s166, %s169
      %p175 = scmp.eq.s32.totalorder %s17, 0
      %p176 = por %p174, %p175
      %p177 = scmp.ne.s32.totalorder %s166, %s169
      %p178 = scmp.eq.s32.totalorder %s22, 1
      %p179 = por %p177, %p178
      %p180 = scmp.ne.s32.totalorder %s169, %s170
      %p181 = scmp.eq.s32.totalorder %s22, 0
      %p182 = por %p180, %p181
      %p183 = scmp.ne.s32.totalorder %s169, %s170
      %p184 = scmp.eq.s32.totalorder %s23, 1
      %p185 = por %p183, %p184
      %p187 = scmp.ne.s32.totalorder %s170, %s186
      %p188 = scmp.eq.s32.totalorder %s23, 0
      %p189 = por %p187, %p188
      %p190 = scmp.le.s32.totalorder 1, %s17
      %p191 = scmp.lt.s32.totalorder %s17, 3
      %p192 = pnand %p190, %p191
      %p193 = pneg %p192
      // Predicated region
      $region9: #{tpu_custom_call.1} parent=5 // pred_check
        _
      $region10: #{tpu_custom_call.1} parent=5 // pred_check_branch
        %195 = sbr.rel (%p192) target = $region12
      $region11: #{tpu_custom_call.1} parent=5 // pred_region
        %s196 = ssub.s32 %s17, 1
      $region12: #{tpu_custom_call.1} parent=5 // pred_fallthru
        _
      %p197 = scmp.lt.s32.totalorder %s17, 2
      // Predicated region
      $region13: #{tpu_custom_call.1} parent=5 // pred_check
        %p198 = pneg %p197
      $region14: #{tpu_custom_call.1} parent=5 // pred_check_branch
        %200 = sbr.rel (%p198) target = $region16
      $region15: #{tpu_custom_call.1} parent=5 // pred_region
        // Predicated region
        $region17: #{tpu_custom_call.1} parent=15 // pred_check
          %p201 = pneg %p60
        $region18: #{tpu_custom_call.1} parent=15 // pred_check_branch
          %203 = sbr.rel (%p201) target = $region20
        $region19: #{tpu_custom_call.1} parent=15 // pred_region
          %s204 = sand.u32 %s50, 1
          %s205 = scalar_lea.sflag [#allocation3], %s204
          %s206 = sand.u32 %s50, 1
          %s207 = smul.addr %s206, 32
          %s208 = scalar_lea.vmem [#allocation2], %s207
          %s209 = sadd.s32 %s24, %s26
          %s210 = smul.u32 8, %s209
          %s212 = ssub.s32 512, 512
          %213 = vsyncadd %s205, %s212
          %s214 = smul.addr %s25, 8
          %s215 = sadd.s32 %s210, %s214
          %s216 = smul.addr %s215, 64
          %s217 = scalar_lea.hbm %s0, %s216
          %s219 = sshll.u32 %s208, 4
          %s220 = int_to_ptr.vmem [resolvable:$true] %s219
          %222 = dma.hbm_to_vmem [thread:$0]  %s217, 512, %s220, %s205
        $region20: #{tpu_custom_call.1} parent=15 // pred_fallthru
          _
        // Predicated region
        $region21: #{tpu_custom_call.1} parent=15 // pred_check
          %p223 = pneg %p90
        $region22: #{tpu_custom_call.1} parent=15 // pred_check_branch
          %225 = sbr.rel (%p223) target = $region24
        $region23: #{tpu_custom_call.1} parent=15 // pred_region
          %s226 = sand.u32 %s17, 1
          %s227 = scalar_lea.sflag [#allocation5], %s226
          %s228 = sand.u32 %s80, 1
          %s229 = smul.addr %s228, 32
          %s230 = scalar_lea.vmem [#allocation4], %s229
          %s231 = sadd.s32 %s24, %s26
          %s232 = smul.u32 8, %s231
          %s234 = ssub.s32 512, 512
          %235 = vsyncadd %s227, %s234
          %s236 = smul.addr %s25, 8
          %s237 = sadd.s32 %s232, %s236
          %s238 = smul.addr %s237, 64
          %s239 = scalar_lea.hbm %s1, %s238
          %s241 = sshll.u32 %s230, 4
          %s242 = int_to_ptr.vmem [resolvable:$true] %s241
          %244 = dma.hbm_to_vmem [thread:$0]  %s239, 512, %s242, %s227
        $region24: #{tpu_custom_call.1} parent=15 // pred_fallthru
          _
        // Predicated region
        $region25: #{tpu_custom_call.1} parent=15 // pred_check
          %p245 = pneg %p120
        $region26: #{tpu_custom_call.1} parent=15 // pred_check_branch
          %247 = sbr.rel (%p245) target = $region28
        $region27: #{tpu_custom_call.1} parent=15 // pred_region
          %s248 = sand.u32 %s17, 1
          %s249 = scalar_lea.sflag [#allocation5], %s248
          %s250 = sand.u32 %s110, 1
          %s251 = smul.addr %s250, 8
          %s252 = scalar_lea.vmem [#allocation6], %s251
          %s253 = sadd.s32 %s24, %s26
          %s254 = smul.u32 8, %s253
          %s256 = ssub.s32 128, 128
          %257 = vsyncadd %s249, %s256
          %s258 = smul.addr %s25, 8
          %s259 = sadd.s32 %s254, %s258
          %s260 = smul.addr %s259, 16
          %s261 = scalar_lea.hbm %s2, %s260
          %s263 = sshll.u32 %s252, 4
          %s264 = int_to_ptr.vmem [resolvable:$true] %s263
          %266 = dma.hbm_to_vmem [thread:$0]  %s261, 128, %s264, %s249
        $region28: #{tpu_custom_call.1} parent=15 // pred_fallthru
          _
      $region16: #{tpu_custom_call.1} parent=5 // pred_fallthru
        _
      %p267 = scmp.le.s32.totalorder 1, %s17
      %p268 = scmp.lt.s32.totalorder %s17, 3
      %p269 = pnand %p267, %p268
      %p270 = pneg %p269
      // Predicated region
      $region29: #{tpu_custom_call.1} parent=5 // pred_check
        _
      $region30: #{tpu_custom_call.1} parent=5 // pred_check_branch
        %272 = sbr.rel (%p269) target = $region32
      $region31: #{tpu_custom_call.1} parent=5 // pred_region
        %s273 = ssub.s32 %s17, 1
        %s274 = sand.u32 %s53, 1
        %s275 = scalar_lea.sflag [#allocation3], %s274
        %s276 = sand.u32 %s53, 1
        %s277 = smul.addr %s276, 32
        %s278 = scalar_lea.vmem [#allocation2], %s277
        // Predicated region
        $region33: #{tpu_custom_call.1} parent=31 // pred_check
          %p279 = pneg %p66
        $region34: #{tpu_custom_call.1} parent=31 // pred_check_branch
          %281 = sbr.rel (%p279) target = $region36
        $region35: #{tpu_custom_call.1} parent=31 // pred_region
          %282 = dma.done %s275, 512
        $region36: #{tpu_custom_call.1} parent=31 // pred_fallthru
          _
        %s283 = sand.u32 %s22, 1
        %s284 = scalar_lea.sflag [#allocation5], %s283
        %s285 = sand.u32 %s83, 1
        %s286 = smul.addr %s285, 32
        %s287 = scalar_lea.vmem [#allocation4], %s286
        // Predicated region
        $region37: #{tpu_custom_call.1} parent=31 // pred_check
          %p288 = pneg %p96
        $region38: #{tpu_custom_call.1} parent=31 // pred_check_branch
          %290 = sbr.rel (%p288) target = $region40
        $region39: #{tpu_custom_call.1} parent=31 // pred_region
          %291 = dma.done %s284, 512
        $region40: #{tpu_custom_call.1} parent=31 // pred_fallthru
          _
        %s292 = sand.u32 %s22, 1
        %s293 = scalar_lea.sflag [#allocation5], %s292
        %s294 = sand.u32 %s113, 1
        %s295 = smul.addr %s294, 8
        %s296 = scalar_lea.vmem [#allocation6], %s295
        // Predicated region
        $region41: #{tpu_custom_call.1} parent=31 // pred_check
          %p297 = pneg %p126
        $region42: #{tpu_custom_call.1} parent=31 // pred_check_branch
          %299 = sbr.rel (%p297) target = $region44
        $region43: #{tpu_custom_call.1} parent=31 // pred_region
          %300 = dma.done %s293, 128
        $region44: #{tpu_custom_call.1} parent=31 // pred_fallthru
          _
        %s301 = sand.u32 %s53, 1
        %s302 = scalar_lea.sflag [#allocation3], %s301
        %s303 = sand.u32 %s53, 1
        %s304 = smul.addr %s303, 32
        %s305 = scalar_lea.vmem [#allocation2], %s304
        %p306 = pneg %p66
        %p307 = pneg %p63
        %s308 = sand.u32 %s22, 1
        %s309 = scalar_lea.sflag [#allocation5], %s308
        %s310 = sand.u32 %s83, 1
        %s311 = smul.addr %s310, 32
        %s312 = scalar_lea.vmem [#allocation4], %s311
        %p313 = pneg %p96
        %p314 = pneg %p93
        %s315 = sand.u32 %s22, 1
        %s316 = scalar_lea.sflag [#allocation5], %s315
        %s317 = sand.u32 %s113, 1
        %s318 = smul.addr %s317, 8
        %s319 = scalar_lea.vmem [#allocation6], %s318
        %p320 = pneg %p126
        %p321 = pneg %p123
        %p322 = pneg %p154
        %p323 = pneg %p151
        %p324 = scmp.lt.s32.totalorder %s27, 0
        %s325 = scalar_select %p324, %s27, 0
        %p326 = scmp.lt.s32.totalorder %s28, 1
        %s327 = scalar_select %p326, %s28, 1
        %s328 = smul.addr %s325, 2
        %s329 = sadd.s32 %s327, %s328
        %s330 = smul.addr %s329, 4
        %s331 = scalar_lea.vmem %s3, %s330
        %p332 = pneg %p182
        %p333 = pneg %p179
        %p334 = scmp.lt.s32.totalorder %s27, 0
        %s335 = scalar_select %p334, %s27, 0
        %p336 = scmp.lt.s32.totalorder %s28, 1
        %s337 = scalar_select %p336, %s28, 1
        %s338 = smul.addr %s335, 2
        %s339 = sadd.s32 %s337, %s338
        %s340 = smul.addr %s339, 4
        %s341 = scalar_lea.vmem %s4, %s340
        %s342 = sadd.s32 %s27, %s29
        %s343 = smul.u32 8, %s342
        %s344 = sadd.s32 %s27, %s29
        %s345 = smul.u32 8, %s344
        %s346 = sadd.s32 %s27, %s29
        %s347 = smul.u32 8, %s346
        %p348 = scmp.lt.s32.totalorder %s27, 0
        %s349 = scalar_select %p348, %s27, 0
        %p350 = scmp.lt.s32.totalorder %s28, 1
        %s351 = scalar_select %p350, %s28, 1
        %s352 = smul.addr %s349, 2
        %s353 = sadd.s32 %s351, %s352
        %s354 = smul.addr %s353, 4
        %s355 = scalar_lea.vmem %s3, %s354
        %p356 = scmp.lt.s32.totalorder %s27, 0
        %s357 = scalar_select %p356, %s27, 0
        %p358 = scmp.lt.s32.totalorder %s28, 1
        %s359 = scalar_select %p358, %s28, 1
        %s360 = smul.addr %s357, 2
        %s361 = sadd.s32 %s359, %s360
        %s362 = smul.addr %s361, 4
        %s363 = scalar_lea.vmem %s4, %s362
        %p364 = scmp.eq.s32.totalorder %s29, 0
        // Predicated region
        $region45: #{tpu_custom_call.1} parent=31 // pred_check
          %p365 = pneg %p364
        $region46: #{tpu_custom_call.1} parent=31 // pred_check_branch
          %367 = sbr.rel (%p365) target = $region48
        $region47: #{tpu_custom_call.1} parent=31 // pred_region
          %vm368 = vcmask 3072
          %369 = vst.msk [vmem:[%s355] sm:$0xf] %vm368, 0.0
          %370 = vst.msk [vmem:[%s363] sm:$0xf] %vm368, 0.0
        $region48: #{tpu_custom_call.1} parent=31 // pred_fallthru
          _
        %v371 = vlaneseq
        %v372 = vshrl.u32 %v371, 7
        %v373 = vld [vmem:[%s278] sm:$0xff]
        %v374 = vld [vmem:[%s278 + $0x8] sm:$0xff]
        %v375 = vld [vmem:[%s278 + $0x10] sm:$0xff]
        %v376 = vld [vmem:[%s278 + $0x18] sm:$0xff]
        %v377 = vld [vmem:[%s287] sm:$0xff]
        %v378 = vld [vmem:[%s287 + $0x8] sm:$0xff]
        %v379 = vld [vmem:[%s287 + $0x10] sm:$0xff]
        %v380 = vld [vmem:[%s287 + $0x18] sm:$0xff]
        %v381 = vld [vmem:[%s296] sm:$0xff]
        %v382 = vadd.f32 %v373, %v377
        %v383 = vadd.f32 %v374, %v378
        %v384 = vadd.f32 %v375, %v379
        %v385 = vadd.f32 %v376, %v380
        %v386 = vlaneseq
        %v387 = vshrl.u32 %v386, 7
        %v388 = vsub.s32 0, %v387
        %v389 = vrot.slane %v381, %v388
        %v390 = vlaneseq
        %v391 = vshrl.u32 %v390, 7
        %v392 = vsub.s32 1, %v391
        %v393 = vrot.slane %v381, %v392
        %v394 = vlaneseq
        %v395 = vshrl.u32 %v394, 7
        %v396 = vsub.s32 2, %v395
        %v397 = vrot.slane %v381, %v396
        %v398 = vlaneseq
        %v399 = vshrl.u32 %v398, 7
        %v400 = vsub.s32 3, %v399
        %v401 = vrot.slane %v381, %v400
        %v402 = vlaneseq
        %v403 = vshrl.u32 %v402, 7
        %v404 = vsub.s32 4, %v403
        %v405 = vrot.slane %v381, %v404
        %v406 = vlaneseq
        %v407 = vshrl.u32 %v406, 7
        %v408 = vsub.s32 5, %v407
        %v409 = vrot.slane %v381, %v408
        %v410 = vlaneseq
        %v411 = vshrl.u32 %v410, 7
        %v412 = vsub.s32 6, %v411
        %v413 = vrot.slane %v381, %v412
        %v414 = vlaneseq
        %v415 = vshrl.u32 %v414, 7
        %v416 = vsub.s32 7, %v415
        %v417 = vrot.slane %v381, %v416
        %vm418 = vcmp.eq.s32.totalorder %v389, %v372
        %vm419 = vcmp.eq.s32.totalorder %v393, %v372
        %vm420 = vcmp.eq.s32.totalorder %v397, %v372
        %vm421 = vcmp.eq.s32.totalorder %v401, %v372
        %vm422 = vcmp.eq.s32.totalorder %v405, %v372
        %vm423 = vcmp.eq.s32.totalorder %v409, %v372
        %vm424 = vcmp.eq.s32.totalorder %v413, %v372
        %vm425 = vcmp.eq.s32.totalorder %v417, %v372
        %v426 = vmul.f32 %v373, %v377
        %v427 = vmul.f32 %v374, %v378
        %v428 = vmul.f32 %v375, %v379
        %v429 = vmul.f32 %v376, %v380
        %v434 = vcombine.high %v426, %v426
        %v435 = vcombine.high %v427, %v427
        %v436 = vcombine.high %v428, %v428
        %v437 = vcombine.high %v429, %v429
        %v442 = vsel %vm418, %v426, 0.0
        %v443 = vsel %vm419, %v434, 0.0
        %v444 = vsel %vm420, %v427, 0.0
        %v445 = vsel %vm421, %v435, 0.0
        %v446 = vsel %vm422, %v428, 0.0
        %v447 = vsel %vm423, %v436, 0.0
        %v448 = vsel %vm424, %v429, 0.0
        %v449 = vsel %vm425, %v437, 0.0
        %vm450 = vcmask 1043456
        %v451 = vsel %vm450, %v442, 0.0
        %v452 = vsel %vm450, %v443, 0.0
        %v453 = vadd.f32 %v451, %v452
        %v454 = vsel %vm450, %v444, 0.0
        %v455 = vadd.f32 %v453, %v454
        %v456 = vsel %vm450, %v445, 0.0
        %v457 = vadd.f32 %v455, %v456
        %v458 = vsel %vm450, %v446, 0.0
        %v459 = vadd.f32 %v457, %v458
        %v460 = vsel %vm450, %v447, 0.0
        %v461 = vadd.f32 %v459, %v460
        %v462 = vsel %vm450, %v448, 0.0
        %v463 = vadd.f32 %v461, %v462
        %v464 = vsel %vm450, %v449, 0.0
        %v465 = vadd.f32 %v463, %v464
        %466 = vadd.xlane.f32.xlu0 %v465
        %v467 = vpop.xlane.xlu0 %466
        %v468 = vadd.f32 %v467, 0.0
        %v473 = vcombine.high %v382, %v382
        %v474 = vcombine.high %v383, %v383
        %v475 = vcombine.high %v384, %v384
        %v476 = vcombine.high %v385, %v385
        %v481 = vsel %vm450, %v382, 0.0
        %v482 = vsel %vm450, %v473, 0.0
        %v483 = vadd.f32 %v481, %v482
        %v484 = vsel %vm450, %v383, 0.0
        %v485 = vadd.f32 %v483, %v484
        %v486 = vsel %vm450, %v474, 0.0
        %v487 = vadd.f32 %v485, %v486
        %v488 = vsel %vm450, %v384, 0.0
        %v489 = vadd.f32 %v487, %v488
        %v490 = vsel %vm450, %v475, 0.0
        %v491 = vadd.f32 %v489, %v490
        %v492 = vsel %vm450, %v385, 0.0
        %v493 = vadd.f32 %v491, %v492
        %v494 = vsel %vm450, %v476, 0.0
        %v495 = vadd.f32 %v493, %v494
        %496 = vadd.xlane.f32.xlu0 %v495
        %v497 = vpop.xlane.xlu0 %496
        %v498 = vadd.f32 %v497, 0.0
        %v499 = vsel %vm418, 1, 0
        %v500 = vsel %vm419, 1, 0
        %v501 = vsel %vm420, 1, 0
        %v502 = vsel %vm421, 1, 0
        %v503 = vsel %vm422, 1, 0
        %v504 = vsel %vm423, 1, 0
        %v505 = vsel %vm424, 1, 0
        %v506 = vsel %vm425, 1, 0
        %v507 = vcvt.s32.f32 %v499
        %v508 = vcvt.s32.f32 %v500
        %v509 = vcvt.s32.f32 %v501
        %v510 = vcvt.s32.f32 %v502
        %v511 = vcvt.s32.f32 %v503
        %v512 = vcvt.s32.f32 %v504
        %v513 = vcvt.s32.f32 %v505
        %v514 = vcvt.s32.f32 %v506
        %v515 = vsel %vm450, %v507, 0.0
        %v516 = vsel %vm450, %v508, 0.0
        %v517 = vadd.f32 %v515, %v516
        %v518 = vsel %vm450, %v509, 0.0
        %v519 = vadd.f32 %v517, %v518
        %v520 = vsel %vm450, %v510, 0.0
        %v521 = vadd.f32 %v519, %v520
        %v522 = vsel %vm450, %v511, 0.0
        %v523 = vadd.f32 %v521, %v522
        %v524 = vsel %vm450, %v512, 0.0
        %v525 = vadd.f32 %v523, %v524
        %v526 = vsel %vm450, %v513, 0.0
        %v527 = vadd.f32 %v525, %v526
        %v528 = vsel %vm450, %v514, 0.0
        %v529 = vadd.f32 %v527, %v528
        %530 = vadd.xlane.f32.xlu0 %v529
        %v531 = vpop.xlane.xlu0 %530
        %v532 = vadd.f32 %v498, %v531
        %v533 = vld [vmem:[%s355] sm:$0xf]
        %v534 = vadd.f32 %v533, %v468
        %vm535 = vcmask 3072
        %536 = vst.msk [vmem:[%s355] sm:$0xf] %vm535, %v534
        %v537 = vld [vmem:[%s363] sm:$0xf]
        %v538 = vadd.f32 %v537, %v532
        %539 = vst.msk [vmem:[%s363] sm:$0xf] %vm535, %v538
        %p540 = scmp.lt.s32.totalorder %s27, 0
        %s541 = scalar_select %p540, %s27, 0
        %p542 = scmp.lt.s32.totalorder %s28, 1
        %s543 = scalar_select %p542, %s28, 1
        %s544 = smul.addr %s541, 2
        %s545 = sadd.s32 %s543, %s544
        %s546 = smul.addr %s545, 4
        %s547 = scalar_lea.vmem %s3, %s546
        %p548 = scmp.lt.s32.totalorder %s27, 0
        %s549 = scalar_select %p548, %s27, 0
        %p550 = scmp.lt.s32.totalorder %s28, 1
        %s551 = scalar_select %p550, %s28, 1
        %s552 = smul.addr %s549, 2
        %s553 = sadd.s32 %s551, %s552
        %s554 = smul.addr %s553, 4
        %s555 = scalar_lea.vmem %s4, %s554
        // Predicated region
        $region49: #{tpu_custom_call.1} parent=31 // pred_check
          %p556 = pneg %p151
        $region50: #{tpu_custom_call.1} parent=31 // pred_check_branch
          %558 = sbr.rel (%p556) target = $region52
        $region51: #{tpu_custom_call.1} parent=31 // pred_region
          _
        $region52: #{tpu_custom_call.1} parent=31 // pred_fallthru
          _
        // Predicated region
        $region53: #{tpu_custom_call.1} parent=31 // pred_check
          %p559 = pneg %p179
        $region54: #{tpu_custom_call.1} parent=31 // pred_check_branch
          %561 = sbr.rel (%p559) target = $region56
        $region55: #{tpu_custom_call.1} parent=31 // pred_region
          _
        $region56: #{tpu_custom_call.1} parent=31 // pred_fallthru
          _
      $region32: #{tpu_custom_call.1} parent=5 // pred_fallthru
        _
      %p562 = scmp.le.s32.totalorder 2, %s17
      // Predicated region
      $region57: #{tpu_custom_call.1} parent=5 // pred_check
        %p563 = pneg %p562
      $region58: #{tpu_custom_call.1} parent=5 // pred_check_branch
        %565 = sbr.rel (%p563) target = $region60
      $region59: #{tpu_custom_call.1} parent=5 // pred_region
        %s566 = ssub.s32 %s17, 2
        // Predicated region
        $region61: #{tpu_custom_call.1} parent=59 // pred_check
          %p567 = pneg %p157
        $region62: #{tpu_custom_call.1} parent=59 // pred_check_branch
          %569 = sbr.rel (%p567) target = $region64
        $region63: #{tpu_custom_call.1} parent=59 // pred_region
          %p570 = scmp.lt.s32.totalorder %s30, 0
          %s571 = scalar_select %p570, %s30, 0
          %p572 = scmp.lt.s32.totalorder %s31, 1
          %s573 = scalar_select %p572, %s31, 1
          %s574 = smul.addr %s571, 2
          %s575 = sadd.s32 %s573, %s574
          %s576 = smul.addr %s575, 4
          %s577 = scalar_lea.vmem %s3, %s576
        $region64: #{tpu_custom_call.1} parent=59 // pred_fallthru
          _
        // Predicated region
        $region65: #{tpu_custom_call.1} parent=59 // pred_check
          %p578 = pneg %p185
        $region66: #{tpu_custom_call.1} parent=59 // pred_check_branch
          %580 = sbr.rel (%p578) target = $region68
        $region67: #{tpu_custom_call.1} parent=59 // pred_region
          %p581 = scmp.lt.s32.totalorder %s30, 0
          %s582 = scalar_select %p581, %s30, 0
          %p583 = scmp.lt.s32.totalorder %s31, 1
          %s584 = scalar_select %p583, %s31, 1
          %s585 = smul.addr %s582, 2
          %s586 = sadd.s32 %s584, %s585
          %s587 = smul.addr %s586, 4
          %s588 = scalar_lea.vmem %s4, %s587
        $region68: #{tpu_custom_call.1} parent=59 // pred_fallthru
          _
      $region60: #{tpu_custom_call.1} parent=5 // pred_fallthru
        _
    $region6: #{tpu_custom_call.1} parent=1 // loop_footer
      %s21 = sadd.s32 1, %s17
    $region7: #{tpu_custom_call.1} parent=1 // loop_footer_branch
      %16 = sbr.rel target = $region3
    $region8: #{tpu_custom_call.1} parent=1 // loop_exit
      _
    %589 = vsyncpa [#allocation3], 1
    %s590 = scalar_lea.sflag [#allocation3], 1
    %591 = vsyncpa %s590, 1
    %592 = vsyncpa [#allocation5], 1
    %s593 = scalar_lea.sflag [#allocation5], 1
    %594 = vsyncpa %s593, 1

</llo_original>
